<compile_context>
chip_gen: v7x
topology: tpu7x:2x2x1
jax: 0.10.0
libtpu: 0.0.40
codegen_flags: <defaults>
</compile_context>

<pallas_src>
import functools

import jax
import jax.numpy as jnp
from jax.experimental import pallas as pl
from jax.experimental.pallas import tpu as pltpu

N_DATAPOINTS = 11
HIDDEN = N_DATAPOINTS * 2          # 22
NEG_SLOPE = 0.01                   # PyTorch LeakyReLU default


def _leaky_relu(x):
    return jnp.where(x >= 0, x, NEG_SLOPE * x)


def _round_up(a, m):
    return ((a + m - 1) // m) * m


def _default_group():
    """Batch elements folded per block-diagonal group.

    22*G is the per-layer contraction/output width, so G=10 fills a 256-wide
    MXU (v6e / v7x) and G=5 fills a 128-wide MXU (v5e and older)."""
    try:
        kind = jax.devices()[0].device_kind.lower()
        if ("v6" in kind) or ("v7" in kind) or ("7x" in kind):
            return 10
        return 5
    except Exception:
        return 10


def _row_offsets(group):
    """Sublane-aligned row offsets of the 4 block-diag weights in the slab."""
    d_in1 = N_DATAPOINTS * group          # 11*G
    d_h = HIDDEN * group                  # 22*G
    o1 = 0
    o2 = o1 + _round_up(d_in1, 8)
    o3 = o2 + _round_up(d_h, 8)
    o4 = o3 + _round_up(d_h, 8)
    rows = o4 + _round_up(d_h, 8)
    return (o1, o2, o3, o4), rows


def _pack_params(params, group):
    """Fuse the 4 weights / 4 biases into block-diagonal VMEM slabs.

    w_slab[o_l : o_l + in_l*G, : out_l*G] = block_diag(G copies of W_l^T)
    b_slab[l, : out_l*G]                  = tile(b_l, G)
    Zero off-diagonal blocks keep the G folded batch groups independent, so the
    math is identical to the unfolded layers (zero terms add exactly 0.0).
    """
    d_h = HIDDEN * group
    offs, rows = _row_offsets(group)
    eye = jnp.eye(group, dtype=jnp.float32)
    w_slab = jnp.zeros((rows, d_h), jnp.float32)
    b_slab = jnp.zeros((8, d_h), jnp.float32)
    for idx, off in enumerate(offs):
        w = jnp.asarray(params[f"w{idx + 1}"], jnp.float32)        # (out, in)
        b = jnp.asarray(params[f"b{idx + 1}"], jnp.float32).reshape(-1)
        w_bd = jnp.kron(eye, w.T)                                  # (G*in, G*out)
        b_bd = jnp.tile(b, group)                                  # (G*out,)
        w_slab = w_slab.at[off:off + w_bd.shape[0], :w_bd.shape[1]].set(w_bd)
        b_slab = b_slab.at[idx, :b_bd.shape[0]].set(b_bd)
    return w_slab, b_slab


def _make_kernel(group):
    d_in1 = N_DATAPOINTS * group
    d_h = HIDDEN * group
    (o1, o2, o3, o4), _ = _row_offsets(group)

    def kernel(x_ref, w_ref, b_ref, o_ref):
        """Whole folded MLP for one batch tile, entirely in VMEM.

        x_ref: (T, 11*G)   G consecutive batch elements per sublane row.
        w_ref: (rows, 22*G) fused block-diagonal weight slab.
        b_ref: (8, 22*G)    fused bias slab (one row per layer).
        o_ref: (T, G)       one output value per folded batch element.

        Every dot is `activations @ weight`: the small block-diag weight is
        the stationary MXU (RHS) operand; the batch streams through as LHS.
        """
        b = b_ref[...]
        f32 = jnp.float32

        h = _leaky_relu(x_ref[...])                                      # (T, 11G)
        h = _leaky_relu(
            jnp.dot(h, w_ref[o1:o1 + d_in1, :], preferred_element_type=f32)
            + b[0:1, :])                                                 # (T, 22G)
        h = _leaky_relu(
            jnp.dot(h, w_ref[o2:o2 + d_h, :], preferred_element_type=f32)
            + b[1:2, :])                                                 # (T, 22G)
        h = _leaky_relu(
            jnp.dot(h, w_ref[o3:o3 + d_h, :], preferred_element_type=f32)
            + b[2:3, :])                                                 # (T, 22G)
        # Final 22G -> G layer stays a (folded, N=G) MXU matmul: a VPU/XLU
        # segmented lane-reduce would need a (T, G, 22) relayout costing more
        # than the matmul it replaces.
        out = (jnp.dot(h, w_ref[o4:o4 + d_h, 0:group], preferred_element_type=f32)
               + b[3:4, 0:group])                                        # (T, G)
        o_ref[...] = out.astype(o_ref.dtype)

    return kernel


def _forward_folded(x, params, group, tile_rows):
    """Pallas path for a batch whose size is a multiple of `group`."""
    batch = x.shape[0]
    rows = batch // group
    d_in1 = N_DATAPOINTS * group

    w_slab, b_slab = _pack_params(params, group)
    # Free, contiguous reshape: row r holds batch elements r*G .. r*G + G - 1.
    xf = x.astype(jnp.float32).reshape(rows, d_in1)

    # Big tiles amortize the ~0.35us/step grid overhead; keep >=2 steps when
    # there is enough work so both v7x TensorCores get a share.
    n_steps = max(2 if rows >= 1024 else 1, pl.cdiv(rows, tile_rows))
    tile = rows if n_steps == 1 else _round_up(pl.cdiv(rows, n_steps), 8)
    grid = (pl.cdiv(rows, tile),)

    flops = 2 * batch * (HIDDEN * N_DATAPOINTS + 2 * HIDDEN * HIDDEN + HIDDEN)
    bytes_accessed = int((xf.size + rows * group + w_slab.size + b_slab.size) * 4)

    out = pl.pallas_call(
        _make_kernel(group),
        out_shape=jax.ShapeDtypeStruct((rows, group), jnp.float32),
        grid_spec=pltpu.PrefetchScalarGridSpec(
            num_scalar_prefetch=0,
            grid=grid,
            in_specs=[
                pl.BlockSpec((tile, d_in1), lambda i: (i, 0)),   # folded batch tile
                pl.BlockSpec(w_slab.shape, lambda i: (0, 0)),    # weights (resident)
                pl.BlockSpec(b_slab.shape, lambda i: (0, 0)),    # biases  (resident)
            ],
            # The (tile, G) output is lane-narrow, but it is only 4 bytes per
            # batch element (~tile/8 masked stores, <1% of the per-tile MXU
            # time); relayouting to a lane-dense slab would cost more.
            out_specs=pl.BlockSpec((tile, group), lambda i: (i, 0)),
        ),
        compiler_params=pltpu.CompilerParams(
            dimension_semantics=("parallel",),
        ),
        cost_estimate=pl.CostEstimate(
            flops=flops, transcendentals=0, bytes_accessed=bytes_accessed),
    )(xf, w_slab, b_slab)

    return out.reshape(batch, 1)


def _mlp_jnp(x, params):
    """Plain-JAX forward (same math). Used for the <G ragged tail and as the
    test reference."""
    h = _leaky_relu(x.astype(jnp.float32))
    h = _leaky_relu(h @ params["w1"].T + params["b1"])
    h = _leaky_relu(h @ params["w2"].T + params["b2"])
    h = _leaky_relu(h @ params["w3"].T + params["b3"])
    return h @ params["w4"].T + params["b4"]


@functools.partial(jax.jit, static_argnames=("tile_rows", "group"))
def _lsd_forward_jit(x, params, *, tile_rows, group):
    batch = x.shape[0]
    main = (batch // group) * group
    rem = batch - main
    pieces = []
    if main > 0:
        x_main = x if rem == 0 else x[:main]
        pieces.append(_forward_folded(x_main, params, group, tile_rows))
    if rem > 0:
        # At most group-1 leftover elements: exact jnp path, negligible cost.
        pieces.append(_mlp_jnp(x[main:], params))
    return pieces[0] if len(pieces) == 1 else jnp.concatenate(pieces, axis=0)


def lsd_forward(x, params, *, tile_rows=2048, group=None):
    """x: (B, 11) float32 -> (B, 1) float32, same math as the PyTorch module."""
    assert x.ndim == 2 and x.shape[1] == N_DATAPOINTS
    g = int(group) if group is not None else _default_group()
    return _lsd_forward_jit(x, params, tile_rows=int(tile_rows), group=g)


def init_params(key):
    """PyTorch-style init: W (out,in), b (out,), uniform(+-1/sqrt(fan_in))."""
    dims = [(HIDDEN, N_DATAPOINTS), (HIDDEN, HIDDEN), (HIDDEN, HIDDEN), (1, HIDDEN)]
    params = {}
    keys = jax.random.split(key, 2 * len(dims))
    for idx, (fan_out, fan_in) in enumerate(dims):
        bound = 1.0 / float(fan_in) ** 0.5
        params[f"w{idx + 1}"] = jax.random.uniform(
            keys[2 * idx], (fan_out, fan_in), minval=-bound, maxval=bound,
            dtype=jnp.float32)
        params[f"b{idx + 1}"] = jax.random.uniform(
            keys[2 * idx + 1], (fan_out,), minval=-bound, maxval=bound,
            dtype=jnp.float32)
    return params


if __name__ == "__main__":
    key = jax.random.PRNGKey(0)
    pkey, xkey = jax.random.split(key)
    params = init_params(pkey)

    def _check(x, y, name):
        ref = _mlp_jnp(x, params)
        err = float(jnp.max(jnp.abs(y - ref)))
        assert y.shape == ref.shape, (name, y.shape, ref.shape)
        assert jnp.allclose(y, ref, atol=2e-4, rtol=2e-4), (name, err)

    # 1) Small batch: single-block Pallas path (+ <G ragged jnp tail).
    x1 = jax.random.normal(xkey, (24, N_DATAPOINTS), dtype=jnp.float32)
    y1 = jax.block_until_ready(lsd_forward(x1, params))
    _check(x1, y1, "small")

    # 2) Multi-step grid (exercises tiling / both-TensorCore sharding).
    x2 = jax.random.normal(jax.random.fold_in(xkey, 1),
                           (2560, N_DATAPOINTS), dtype=jnp.float32)
    y2 = jax.block_until_ready(lsd_forward(x2, params, tile_rows=64))
    _check(x2, y2, "grid")

    # 3) Ragged batch with a partial last grid block (masked writeback path).
    x3 = jax.random.normal(jax.random.fold_in(xkey, 2),
                           (205, N_DATAPOINTS), dtype=jnp.float32)
    y3 = jax.block_until_ready(lsd_forward(x3, params, tile_rows=8))
    _check(x3, y3, "ragged")

    print("KERNEL_OK")
</pallas_src>

<mosaic_0001>
module attributes {stable_mosaic.version = 11 : i64} {
  func.func @kernel(%arg0: i32, %arg1: memref<4x55xf32, #tpu.memory_space<vmem>>, %arg2: memref<392x110xf32, #tpu.memory_space<vmem>>, %arg3: memref<8x110xf32, #tpu.memory_space<vmem>>, %arg4: memref<4x5xf32, #tpu.memory_space<vmem>>) attributes {dimension_semantics = [#tpu.dimension_semantics<parallel>], iteration_bounds = array<i64: 1>, scalar_prefetch = 0 : i64, scratch_operands = 0 : i64, tpu.core_type = #tpu.core_type<tc>, window_params = [{transform_indices = @transform_0, window_bounds = array<i64: 4, 55>}, {pipeline_mode = #tpu.pipeline_mode<synchronous>, transform_indices = @transform_1, window_bounds = array<i64: 392, 110>}, {pipeline_mode = #tpu.pipeline_mode<synchronous>, transform_indices = @transform_2, window_bounds = array<i64: 8, 110>}, {transform_indices = @transform_3, window_bounds = array<i64: 4, 5>}]} {
    %c0 = arith.constant 0 : index
    %c0_0 = arith.constant 0 : index
    %0 = vector.load %arg3[%c0, %c0_0] : memref<8x110xf32, #tpu.memory_space<vmem>>, vector<8x110xf32>
    %c0_1 = arith.constant 0 : index
    %c0_2 = arith.constant 0 : index
    %1 = vector.load %arg1[%c0_1, %c0_2] : memref<4x55xf32, #tpu.memory_space<vmem>>, vector<4x55xf32>
    %cst = arith.constant 0.000000e+00 : f32
    %2 = vector.broadcast %cst : f32 to vector<4x55xf32>
    %3 = arith.cmpf oge, %1, %2 : vector<4x55xf32>
    %cst_3 = arith.constant 0.00999999977 : f32
    %4 = vector.broadcast %cst_3 : f32 to vector<4x55xf32>
    %5 = arith.mulf %4, %1 : vector<4x55xf32>
    %6 = arith.select %3, %1, %5 : vector<4x55xi1>, vector<4x55xf32>
    %c0_4 = arith.constant 0 : index
    %c0_5 = arith.constant 0 : index
    %7 = vector.load %arg2[%c0_4, %c0_5] : memref<392x110xf32, #tpu.memory_space<vmem>>, vector<55x110xf32>
    %cst_6 = arith.constant dense<0.000000e+00> : vector<4x110xf32>
    %8 = tpu.matmul %6, %7, %cst_6 {dimension_numbers = #tpu.dot_dimension_numbers<[1], [0], [0], [1], [0, 0, 1, 1], [], []>} : vector<4x55xf32>, vector<55x110xf32>, vector<4x110xf32> -> vector<4x110xf32>
    %9 = vector.extract_strided_slice %0 {offsets = [0, 0], sizes = [1, 110], strides = [1, 1]} : vector<8x110xf32> to vector<1x110xf32>
    %10 = vector.broadcast %9 : vector<1x110xf32> to vector<4x110xf32>
    %11 = arith.addf %8, %10 : vector<4x110xf32>
    %cst_7 = arith.constant 0.000000e+00 : f32
    %12 = vector.broadcast %cst_7 : f32 to vector<4x110xf32>
    %13 = arith.cmpf oge, %11, %12 : vector<4x110xf32>
    %cst_8 = arith.constant 0.00999999977 : f32
    %14 = vector.broadcast %cst_8 : f32 to vector<4x110xf32>
    %15 = arith.mulf %14, %11 : vector<4x110xf32>
    %16 = arith.select %13, %11, %15 : vector<4x110xi1>, vector<4x110xf32>
    %c56 = arith.constant 56 : index
    %c0_9 = arith.constant 0 : index
    %17 = vector.load %arg2[%c56, %c0_9] : memref<392x110xf32, #tpu.memory_space<vmem>>, vector<110x110xf32>
    %cst_10 = arith.constant dense<0.000000e+00> : vector<4x110xf32>
    %18 = tpu.matmul %16, %17, %cst_10 {dimension_numbers = #tpu.dot_dimension_numbers<[1], [0], [0], [1], [0, 0, 1, 1], [], []>} : vector<4x110xf32>, vector<110x110xf32>, vector<4x110xf32> -> vector<4x110xf32>
    %19 = vector.extract_strided_slice %0 {offsets = [1, 0], sizes = [1, 110], strides = [1, 1]} : vector<8x110xf32> to vector<1x110xf32>
    %20 = vector.broadcast %19 : vector<1x110xf32> to vector<4x110xf32>
    %21 = arith.addf %18, %20 : vector<4x110xf32>
    %cst_11 = arith.constant 0.000000e+00 : f32
    %22 = vector.broadcast %cst_11 : f32 to vector<4x110xf32>
    %23 = arith.cmpf oge, %21, %22 : vector<4x110xf32>
    %cst_12 = arith.constant 0.00999999977 : f32
    %24 = vector.broadcast %cst_12 : f32 to vector<4x110xf32>
    %25 = arith.mulf %24, %21 : vector<4x110xf32>
    %26 = arith.select %23, %21, %25 : vector<4x110xi1>, vector<4x110xf32>
    %c168 = arith.constant 168 : index
    %c0_13 = arith.constant 0 : index
    %27 = vector.load %arg2[%c168, %c0_13] : memref<392x110xf32, #tpu.memory_space<vmem>>, vector<110x110xf32>
    %cst_14 = arith.constant dense<0.000000e+00> : vector<4x110xf32>
    %28 = tpu.matmul %26, %27, %cst_14 {dimension_numbers = #tpu.dot_dimension_numbers<[1], [0], [0], [1], [0, 0, 1, 1], [], []>} : vector<4x110xf32>, vector<110x110xf32>, vector<4x110xf32> -> vector<4x110xf32>
    %29 = vector.extract_strided_slice %0 {offsets = [2, 0], sizes = [1, 110], strides = [1, 1]} : vector<8x110xf32> to vector<1x110xf32>
    %30 = vector.broadcast %29 : vector<1x110xf32> to vector<4x110xf32>
    %31 = arith.addf %28, %30 : vector<4x110xf32>
    %cst_15 = arith.constant 0.000000e+00 : f32
    %32 = vector.broadcast %cst_15 : f32 to vector<4x110xf32>
    %33 = arith.cmpf oge, %31, %32 : vector<4x110xf32>
    %cst_16 = arith.constant 0.00999999977 : f32
    %34 = vector.broadcast %cst_16 : f32 to vector<4x110xf32>
    %35 = arith.mulf %34, %31 : vector<4x110xf32>
    %36 = arith.select %33, %31, %35 : vector<4x110xi1>, vector<4x110xf32>
    %c280 = arith.constant 280 : index
    %c0_17 = arith.constant 0 : index
    %37 = vector.load %arg2[%c280, %c0_17] : memref<392x110xf32, #tpu.memory_space<vmem>>, vector<110x5xf32>
    %cst_18 = arith.constant dense<0.000000e+00> : vector<4x5xf32>
    %38 = tpu.matmul %36, %37, %cst_18 {dimension_numbers = #tpu.dot_dimension_numbers<[1], [0], [0], [1], [0, 0, 1, 1], [], []>} : vector<4x110xf32>, vector<110x5xf32>, vector<4x5xf32> -> vector<4x5xf32>
    %39 = vector.extract_strided_slice %0 {offsets = [3, 0], sizes = [1, 5], strides = [1, 1]} : vector<8x110xf32> to vector<1x5xf32>
    %40 = vector.broadcast %39 : vector<1x5xf32> to vector<4x5xf32>
    %41 = arith.addf %38, %40 : vector<4x5xf32>
    %c0_19 = arith.constant 0 : index
    %c0_20 = arith.constant 0 : index
    %42 = vector.load %arg4[%c0_19, %c0_20] : memref<4x5xf32, #tpu.memory_space<vmem>>, vector<4x5xf32>
    tpu.vector_store %arg4[%c0_19, %c0_20], %41 {strides = array<i32>} : memref<4x5xf32, #tpu.memory_space<vmem>>, vector<4x5xf32>,
    return
  }
  func.func @transform_0(%arg0: i32) -> (i32, i32) {
    %c0_i32 = arith.constant 0 : i32
    %c0_i32_0 = arith.constant 0 : i32
    return %arg0, %c0_i32 : i32, i32
  }
  func.func @transform_1(%arg0: i32) -> (i32, i32) {
    %c0_i32 = arith.constant 0 : i32
    %c0_i32_0 = arith.constant 0 : i32
    %c0_i32_1 = arith.constant 0 : i32
    return %c0_i32, %c0_i32_0 : i32, i32
  }
  func.func @transform_2(%arg0: i32) -> (i32, i32) {
    %c0_i32 = arith.constant 0 : i32
    %c0_i32_0 = arith.constant 0 : i32
    %c0_i32_1 = arith.constant 0 : i32
    return %c0_i32, %c0_i32_0 : i32, i32
  }
  func.func @transform_3(%arg0: i32) -> (i32, i32) {
    %c0_i32 = arith.constant 0 : i32
    %c0_i32_0 = arith.constant 0 : i32
    return %arg0, %c0_i32 : i32, i32
  }
}

</mosaic_0001>

<llo_original>
// kernel: _lsd_forward_jit.1
$region0: #{_lsd_forward_jit.1}
  #allocation0 [shape = 'u32[]', space=smem, size = 0x4, offset = 0x4, fixed_abs, tag = 'smem constant byte address 0x4 - core index']
  #allocation1 [shape = 'u32[144,128]{1,0:T(1,128)}', space=vmem, size = 0x12000, scoped, tag = 'internal scratch']
  %s0 = inlined_call_operand.vmem [shape: f32[4,55], index: 0, kind: input, shape index: {}]
  %s1 = inlined_call_operand.vmem [shape: f32[392,110], index: 1, kind: input, shape index: {}]
  %s2 = inlined_call_operand.vmem [shape: f32[8,110], index: 2, kind: input, shape index: {}]
  %s3 = inlined_call_operand.vmem [shape: f32[4,5], index: 3, kind: output, shape index: {}]
  %s4 = sld [smem:[#allocation0]]
  $region22: #{_lsd_forward_jit.1} parent=0
    _
  %s6 = ssub.s32 1, %s4
  %s7 = scalar_select 0, %s6, %s4
  // Predicated region
  $region2: #{_lsd_forward_jit.1} parent=0 // pred_check
    _
  $region3: #{_lsd_forward_jit.1} parent=0 // pred_check_branch
    %9 = sbr.rel (0) target = $region5
  $region4: #{_lsd_forward_jit.1} parent=0 // pred_region
    _
  $region5: #{_lsd_forward_jit.1} parent=0 // pred_fallthru
    _
  // Predicated region
  $region6: #{_lsd_forward_jit.1} parent=0 // pred_check
    _
  $region7: #{_lsd_forward_jit.1} parent=0 // pred_check_branch
    %11 = sbr.rel (0) target = $region9
  $region8: #{_lsd_forward_jit.1} parent=0 // pred_region
    _
  $region9: #{_lsd_forward_jit.1} parent=0 // pred_fallthru
    _
  // Predicated region
  $region10: #{_lsd_forward_jit.1} parent=0 // pred_check
    _
  $region11: #{_lsd_forward_jit.1} parent=0 // pred_check_branch
    %13 = sbr.rel (0) target = $region13
  $region12: #{_lsd_forward_jit.1} parent=0 // pred_region
    _
  $region13: #{_lsd_forward_jit.1} parent=0 // pred_fallthru
    _
  %v14 = vld [vmem:[%s2] sm:$0xff]
  %v15 = vld [vmem:[%s0] sm:$0xf]
  %vm16 = vcmp.ge.f32.partialorder %v15, 0.0
  %v17 = vmul.f32 %v15, 0.01
  %v18 = vsel %vm16, %v15, %v17
  %v19 = vld [vmem:[%s1] sm:$0xff]
  %v20 = vld [vmem:[%s1 + $0x8] sm:$0xff]
  %v21 = vld [vmem:[%s1 + $0x10] sm:$0xff]
  %v22 = vld [vmem:[%s1 + $0x18] sm:$0xff]
  %v23 = vld [vmem:[%s1 + $0x20] sm:$0xff]
  %v24 = vld [vmem:[%s1 + $0x28] sm:$0xff]
  %v25 = vld [vmem:[%s1 + $0x30] sm:$0x7f]
  %v26 = vlaneseq
  %v27 = vshrl.u32 %v26, 7
  %v28 = vsub.s32 0, %v27
  %v29 = vrot.slane %v14, %v28
  %vm30 = vcmask 449536
  %v32 = vsel %vm30, %v18, 0
  %vm34 = vcmask 1046528
  %v36 = vsel %vm34, %v25, 0
  %38 = vmatprep.subr.mxu0 0.0
  %39 = vmatpush1.msra.mxu0 %v19
  %40 = vmatprep.subr.mxu0 0.0
  %41 = vmatpush1.msra.mxu0 %v20
  %42 = vmatprep.subr.mxu0 0.0
  %43 = vmatpush1.msra.mxu0 %v21
  %44 = vmatprep.subr.mxu0 0.0
  %45 = vmatpush1.msra.mxu0 %v22
  %46 = vmatprep.subr.mxu0 0.0
  %47 = vmatpush1.msra.mxu0 %v23
  %48 = vmatprep.subr.mxu0 0.0
  %49 = vmatpush1.msra.mxu0 %v24
  %50 = vmatprep.subr.mxu0 0.0
  %51 = vmatpush1.msra.mxu0 %v36
  %52 = vmatprep.subr.mxu0 0.0
  %53 = vmatpush1.msra.mxu0 0.0
  %54 = vmatprep.subr.mxu0 0.0
  %55 = vmatpush1.msra.mxu0 0.0
  %56 = vmatprep.subr.mxu0 0.0
  %57 = vmatpush1.msra.mxu0 0.0
  %58 = vmatprep.subr.mxu0 0.0
  %59 = vmatpush1.msra.mxu0 0.0
  %60 = vmatprep.subr.mxu0 0.0
  %61 = vmatpush1.msra.mxu0 0.0
  %62 = vmatprep.subr.mxu0 0.0
  %63 = vmatpush1.msra.mxu0 0.0
  %64 = vmatprep.subr.mxu0 0.0
  %65 = vmatpush1.msra.mxu0 0.0
  %66 = vmatprep.subr.mxu0 0.0
  %67 = vmatpush1.msra.mxu0 0.0
  %68 = vmatprep.subr.mxu0 0.0
  %69 = vmatpush1.msra.mxu0 0.0
  %70 = vmatprep.subr.mxu0 0.0
  %71 = vmatpush1.msra.mxu0 0.0
  %72 = vmatprep.subr.mxu0 0.0
  %73 = vmatpush1.msra.mxu0 0.0
  %74 = vmatprep.subr.mxu0 0.0
  %75 = vmatpush1.msra.mxu0 0.0
  %76 = vmatprep.subr.mxu0 0.0
  %77 = vmatpush1.msra.mxu0 0.0
  %78 = vmatprep.subr.mxu0 0.0
  %79 = vmatpush1.msra.mxu0 0.0
  %80 = vmatprep.subr.mxu0 0.0
  %81 = vmatpush1.msra.mxu0 0.0
  %82 = vmatprep.subr.mxu0 0.0
  %83 = vmatpush1.msra.mxu0 0.0
  %84 = vmatprep.subr.mxu0 0.0
  %85 = vmatpush1.msra.mxu0 0.0
  %86 = vmatprep.subr.mxu0 0.0
  %87 = vmatpush1.msra.mxu0 0.0
  %88 = vmatprep.subr.mxu0 0.0
  %89 = vmatpush1.msra.mxu0 0.0
  %90 = vmatprep.subr.mxu0 0.0
  %91 = vmatpush1.msra.mxu0 0.0
  %92 = vmatprep.subr.mxu0 0.0
  %93 = vmatpush1.msra.mxu0 0.0
  %94 = vmatprep.subr.mxu0 0.0
  %95 = vmatpush1.msra.mxu0 0.0
  %96 = vmatprep.subr.mxu0 0.0
  %97 = vmatpush1.msra.mxu0 0.0
  %98 = vmatprep.subr.mxu0 0.0
  %99 = vmatpush1.msra.mxu0 0.0
  %100 = vmatprep.subr.mxu0 0.0
  %101 = vmatpush1.msra.mxu0 0.0
  %102 = vmatprep.mubr.f32.mxu0 0.0
  %103 = vmatmul.mubr.f32.gmra.mrb[0].mxu0 %v32
  %v104 = vpop.f32.mrb[0].mxu0
  %v105 = vadd.f32 %v29, %v104
  %v106 = vpop.f32.mrb[0].mxu0
  %107 = vdwg.mxu0
  %vm108 = vcmp.ge.f32.partialorder %v105, 0.0
  %v109 = vmul.f32 %v105, 0.01
  %v110 = vsel %vm108, %v105, %v109
  %v111 = vld [vmem:[%s1 + $0x38] sm:$0xff]
  %v112 = vld [vmem:[%s1 + $0x40] sm:$0xff]
  %v113 = vld [vmem:[%s1 + $0x48] sm:$0xff]
  %v114 = vld [vmem:[%s1 + $0x50] sm:$0xff]
  %v115 = vld [vmem:[%s1 + $0x58] sm:$0xff]
  %v116 = vld [vmem:[%s1 + $0x60] sm:$0xff]
  %v117 = vld [vmem:[%s1 + $0x68] sm:$0xff]
  %v118 = vld [vmem:[%s1 + $0x70] sm:$0xff]
  %v119 = vld [vmem:[%s1 + $0x78] sm:$0xff]
  %v120 = vld [vmem:[%s1 + $0x80] sm:$0xff]
  %v121 = vld [vmem:[%s1 + $0x88] sm:$0xff]
  %v122 = vld [vmem:[%s1 + $0x90] sm:$0xff]
  %v123 = vld [vmem:[%s1 + $0x98] sm:$0xff]
  %v124 = vld [vmem:[%s1 + $0xa0] sm:$0x3f]
  %v125 = vlaneseq
  %v126 = vshrl.u32 %v125, 7
  %v127 = vsub.s32 1, %v126
  %v128 = vrot.slane %v14, %v127
  %vm129 = vcmask 900096
  %v131 = vsel %vm129, %v110, 0
  %vm133 = vcmask 1045504
  %v135 = vsel %vm133, %v124, 0
  %137 = vmatprep.subr.mxu0 0.0
  %138 = vmatpush1.msra.mxu0 %v111
  %139 = vmatprep.subr.mxu0 0.0
  %140 = vmatpush1.msra.mxu0 %v112
  %141 = vmatprep.subr.mxu0 0.0
  %142 = vmatpush1.msra.mxu0 %v113
  %143 = vmatprep.subr.mxu0 0.0
  %144 = vmatpush1.msra.mxu0 %v114
  %145 = vmatprep.subr.mxu0 0.0
  %146 = vmatpush1.msra.mxu0 %v115
  %147 = vmatprep.subr.mxu0 0.0
  %148 = vmatpush1.msra.mxu0 %v116
  %149 = vmatprep.subr.mxu0 0.0
  %150 = vmatpush1.msra.mxu0 %v117
  %151 = vmatprep.subr.mxu0 0.0
  %152 = vmatpush1.msra.mxu0 %v118
  %153 = vmatprep.subr.mxu0 0.0
  %154 = vmatpush1.msra.mxu0 %v119
  %155 = vmatprep.subr.mxu0 0.0
  %156 = vmatpush1.msra.mxu0 %v120
  %157 = vmatprep.subr.mxu0 0.0
  %158 = vmatpush1.msra.mxu0 %v121
  %159 = vmatprep.subr.mxu0 0.0
  %160 = vmatpush1.msra.mxu0 %v122
  %161 = vmatprep.subr.mxu0 0.0
  %162 = vmatpush1.msra.mxu0 %v123
  %163 = vmatprep.subr.mxu0 0.0
  %164 = vmatpush1.msra.mxu0 %v135
  %165 = vmatprep.subr.mxu0 0.0
  %166 = vmatpush1.msra.mxu0 0.0
  %167 = vmatprep.subr.mxu0 0.0
  %168 = vmatpush1.msra.mxu0 0.0
  %169 = vmatprep.subr.mxu0 0.0
  %170 = vmatpush1.msra.mxu0 0.0
  %171 = vmatprep.subr.mxu0 0.0
  %172 = vmatpush1.msra.mxu0 0.0
  %173 = vmatprep.subr.mxu0 0.0
  %174 = vmatpush1.msra.mxu0 0.0
  %175 = vmatprep.subr.mxu0 0.0
  %176 = vmatpush1.msra.mxu0 0.0
  %177 = vmatprep.subr.mxu0 0.0
  %178 = vmatpush1.msra.mxu0 0.0
  %179 = vmatprep.subr.mxu0 0.0
  %180 = vmatpush1.msra.mxu0 0.0
  %181 = vmatprep.subr.mxu0 0.0
  %182 = vmatpush1.msra.mxu0 0.0
  %183 = vmatprep.subr.mxu0 0.0
  %184 = vmatpush1.msra.mxu0 0.0
  %185 = vmatprep.subr.mxu0 0.0
  %186 = vmatpush1.msra.mxu0 0.0
  %187 = vmatprep.subr.mxu0 0.0
  %188 = vmatpush1.msra.mxu0 0.0
  %189 = vmatprep.subr.mxu0 0.0
  %190 = vmatpush1.msra.mxu0 0.0
  %191 = vmatprep.subr.mxu0 0.0
  %192 = vmatpush1.msra.mxu0 0.0
  %193 = vmatprep.subr.mxu0 0.0
  %194 = vmatpush1.msra.mxu0 0.0
  %195 = vmatprep.subr.mxu0 0.0
  %196 = vmatpush1.msra.mxu0 0.0
  %197 = vmatprep.subr.mxu0 0.0
  %198 = vmatpush1.msra.mxu0 0.0
  %199 = vmatprep.subr.mxu0 0.0
  %200 = vmatpush1.msra.mxu0 0.0
  %201 = vmatprep.mubr.f32.mxu0 0.0
  %202 = vmatmul.mubr.f32.gmra.mrb[0].mxu0 %v131
  %v203 = vpop.f32.mrb[0].mxu0
  %v204 = vadd.f32 %v128, %v203
  %v205 = vpop.f32.mrb[0].mxu0
  %206 = vdwg.mxu0
  %vm207 = vcmp.ge.f32.partialorder %v204, 0.0
  %v208 = vmul.f32 %v204, 0.01
  %v209 = vsel %vm207, %v204, %v208
  %v210 = vld [vmem:[%s1 + $0xa8] sm:$0xff]
  %v211 = vld [vmem:[%s1 + $0xb0] sm:$0xff]
  %v212 = vld [vmem:[%s1 + $0xb8] sm:$0xff]
  %v213 = vld [vmem:[%s1 + $0xc0] sm:$0xff]
  %v214 = vld [vmem:[%s1 + $0xc8] sm:$0xff]
  %v215 = vld [vmem:[%s1 + $0xd0] sm:$0xff]
  %v216 = vld [vmem:[%s1 + $0xd8] sm:$0xff]
  %v217 = vld [vmem:[%s1 + $0xe0] sm:$0xff]
  %v218 = vld [vmem:[%s1 + $0xe8] sm:$0xff]
  %v219 = vld [vmem:[%s1 + $0xf0] sm:$0xff]
  %v220 = vld [vmem:[%s1 + $0xf8] sm:$0xff]
  %v221 = vld [vmem:[%s1 + $0x100] sm:$0xff]
  %v222 = vld [vmem:[%s1 + $0x108] sm:$0xff]
  %v223 = vld [vmem:[%s1 + $0x110] sm:$0x3f]
  %v224 = vlaneseq
  %v225 = vshrl.u32 %v224, 7
  %v226 = vsub.s32 2, %v225
  %v227 = vrot.slane %v14, %v226
  %v229 = vsel %vm129, %v209, 0
  %v232 = vsel %vm133, %v223, 0
  %234 = vmatprep.subr.mxu0 0.0
  %235 = vmatpush1.msra.mxu0 %v210
  %236 = vmatprep.subr.mxu0 0.0
  %237 = vmatpush1.msra.mxu0 %v211
  %238 = vmatprep.subr.mxu0 0.0
  %239 = vmatpush1.msra.mxu0 %v212
  %240 = vmatprep.subr.mxu0 0.0
  %241 = vmatpush1.msra.mxu0 %v213
  %242 = vmatprep.subr.mxu0 0.0
  %243 = vmatpush1.msra.mxu0 %v214
  %244 = vmatprep.subr.mxu0 0.0
  %245 = vmatpush1.msra.mxu0 %v215
  %246 = vmatprep.subr.mxu0 0.0
  %247 = vmatpush1.msra.mxu0 %v216
  %248 = vmatprep.subr.mxu0 0.0
  %249 = vmatpush1.msra.mxu0 %v217
  %250 = vmatprep.subr.mxu0 0.0
  %251 = vmatpush1.msra.mxu0 %v218
  %252 = vmatprep.subr.mxu0 0.0
  %253 = vmatpush1.msra.mxu0 %v219
  %254 = vmatprep.subr.mxu0 0.0
  %255 = vmatpush1.msra.mxu0 %v220
  %256 = vmatprep.subr.mxu0 0.0
  %257 = vmatpush1.msra.mxu0 %v221
  %258 = vmatprep.subr.mxu0 0.0
  %259 = vmatpush1.msra.mxu0 %v222
  %260 = vmatprep.subr.mxu0 0.0
  %261 = vmatpush1.msra.mxu0 %v232
  %262 = vmatprep.subr.mxu0 0.0
  %263 = vmatpush1.msra.mxu0 0.0
  %264 = vmatprep.subr.mxu0 0.0
  %265 = vmatpush1.msra.mxu0 0.0
  %266 = vmatprep.subr.mxu0 0.0
  %267 = vmatpush1.msra.mxu0 0.0
  %268 = vmatprep.subr.mxu0 0.0
  %269 = vmatpush1.msra.mxu0 0.0
  %270 = vmatprep.subr.mxu0 0.0
  %271 = vmatpush1.msra.mxu0 0.0
  %272 = vmatprep.subr.mxu0 0.0
  %273 = vmatpush1.msra.mxu0 0.0
  %274 = vmatprep.subr.mxu0 0.0
  %275 = vmatpush1.msra.mxu0 0.0
  %276 = vmatprep.subr.mxu0 0.0
  %277 = vmatpush1.msra.mxu0 0.0
  %278 = vmatprep.subr.mxu0 0.0
  %279 = vmatpush1.msra.mxu0 0.0
  %280 = vmatprep.subr.mxu0 0.0
  %281 = vmatpush1.msra.mxu0 0.0
  %282 = vmatprep.subr.mxu0 0.0
  %283 = vmatpush1.msra.mxu0 0.0
  %284 = vmatprep.subr.mxu0 0.0
  %285 = vmatpush1.msra.mxu0 0.0
  %286 = vmatprep.subr.mxu0 0.0
  %287 = vmatpush1.msra.mxu0 0.0
  %288 = vmatprep.subr.mxu0 0.0
  %289 = vmatpush1.msra.mxu0 0.0
  %290 = vmatprep.subr.mxu0 0.0
  %291 = vmatpush1.msra.mxu0 0.0
  %292 = vmatprep.subr.mxu0 0.0
  %293 = vmatpush1.msra.mxu0 0.0
  %294 = vmatprep.subr.mxu0 0.0
  %295 = vmatpush1.msra.mxu0 0.0
  %296 = vmatprep.subr.mxu0 0.0
  %297 = vmatpush1.msra.mxu0 0.0
  %298 = vmatprep.mubr.f32.mxu0 0.0
  %299 = vmatmul.mubr.f32.gmra.mrb[0].mxu0 %v229
  %v300 = vpop.f32.mrb[0].mxu0
  %v301 = vadd.f32 %v227, %v300
  %v302 = vpop.f32.mrb[0].mxu0
  %303 = vdwg.mxu0
  %vm304 = vcmp.ge.f32.partialorder %v301, 0.0
  %v305 = vmul.f32 %v301, 0.01
  %v306 = vsel %vm304, %v301, %v305
  %v307 = vld [vmem:[%s1 + $0x118] sm:$0xff]
  %v308 = vld [vmem:[%s1 + $0x120] sm:$0xff]
  %v309 = vld [vmem:[%s1 + $0x128] sm:$0xff]
  %v310 = vld [vmem:[%s1 + $0x130] sm:$0xff]
  %v311 = vld [vmem:[%s1 + $0x138] sm:$0xff]
  %v312 = vld [vmem:[%s1 + $0x140] sm:$0xff]
  %v313 = vld [vmem:[%s1 + $0x148] sm:$0xff]
  %v314 = vld [vmem:[%s1 + $0x150] sm:$0xff]
  %v315 = vld [vmem:[%s1 + $0x158] sm:$0xff]
  %v316 = vld [vmem:[%s1 + $0x160] sm:$0xff]
  %v317 = vld [vmem:[%s1 + $0x168] sm:$0xff]
  %v318 = vld [vmem:[%s1 + $0x170] sm:$0xff]
  %v319 = vld [vmem:[%s1 + $0x178] sm:$0xff]
  %v320 = vld [vmem:[%s1 + $0x180] sm:$0x3f]
  %v321 = vlaneseq
  %v322 = vshrl.u32 %v321, 7
  %v323 = vsub.s32 3, %v322
  %v324 = vrot.slane %v14, %v323
  %v326 = vsel %vm129, %v306, 0
  %v329 = vsel %vm133, %v320, 0
  %331 = vmatprep.subr.mxu0 0.0
  %332 = vmatpush1.msra.mxu0 %v307
  %333 = vmatprep.subr.mxu0 0.0
  %334 = vmatpush1.msra.mxu0 %v308
  %335 = vmatprep.subr.mxu0 0.0
  %336 = vmatpush1.msra.mxu0 %v309
  %337 = vmatprep.subr.mxu0 0.0
  %338 = vmatpush1.msra.mxu0 %v310
  %339 = vmatprep.subr.mxu0 0.0
  %340 = vmatpush1.msra.mxu0 %v311
  %341 = vmatprep.subr.mxu0 0.0
  %342 = vmatpush1.msra.mxu0 %v312
  %343 = vmatprep.subr.mxu0 0.0
  %344 = vmatpush1.msra.mxu0 %v313
  %345 = vmatprep.subr.mxu0 0.0
  %346 = vmatpush1.msra.mxu0 %v314
  %347 = vmatprep.subr.mxu0 0.0
  %348 = vmatpush1.msra.mxu0 %v315
  %349 = vmatprep.subr.mxu0 0.0
  %350 = vmatpush1.msra.mxu0 %v316
  %351 = vmatprep.subr.mxu0 0.0
  %352 = vmatpush1.msra.mxu0 %v317
  %353 = vmatprep.subr.mxu0 0.0
  %354 = vmatpush1.msra.mxu0 %v318
  %355 = vmatprep.subr.mxu0 0.0
  %356 = vmatpush1.msra.mxu0 %v319
  %357 = vmatprep.subr.mxu0 0.0
  %358 = vmatpush1.msra.mxu0 %v329
  %359 = vmatprep.subr.mxu0 0.0
  %360 = vmatpush1.msra.mxu0 0.0
  %361 = vmatprep.subr.mxu0 0.0
  %362 = vmatpush1.msra.mxu0 0.0
  %363 = vmatprep.subr.mxu0 0.0
  %364 = vmatpush1.msra.mxu0 0.0
  %365 = vmatprep.subr.mxu0 0.0
  %366 = vmatpush1.msra.mxu0 0.0
  %367 = vmatprep.subr.mxu0 0.0
  %368 = vmatpush1.msra.mxu0 0.0
  %369 = vmatprep.subr.mxu0 0.0
  %370 = vmatpush1.msra.mxu0 0.0
  %371 = vmatprep.subr.mxu0 0.0
  %372 = vmatpush1.msra.mxu0 0.0
  %373 = vmatprep.subr.mxu0 0.0
  %374 = vmatpush1.msra.mxu0 0.0
  %375 = vmatprep.subr.mxu0 0.0
  %376 = vmatpush1.msra.mxu0 0.0
  %377 = vmatprep.subr.mxu0 0.0
  %378 = vmatpush1.msra.mxu0 0.0
  %379 = vmatprep.subr.mxu0 0.0
  %380 = vmatpush1.msra.mxu0 0.0
  %381 = vmatprep.subr.mxu0 0.0
  %382 = vmatpush1.msra.mxu0 0.0
  %383 = vmatprep.subr.mxu0 0.0
  %384 = vmatpush1.msra.mxu0 0.0
  %385 = vmatprep.subr.mxu0 0.0
  %386 = vmatpush1.msra.mxu0 0.0
  %387 = vmatprep.subr.mxu0 0.0
  %388 = vmatpush1.msra.mxu0 0.0
  %389 = vmatprep.subr.mxu0 0.0
  %390 = vmatpush1.msra.mxu0 0.0
  %391 = vmatprep.subr.mxu0 0.0
  %392 = vmatpush1.msra.mxu0 0.0
  %393 = vmatprep.subr.mxu0 0.0
  %394 = vmatpush1.msra.mxu0 0.0
  %395 = vmatprep.mubr.f32.mxu0 0.0
  %396 = vmatmul.mubr.f32.gmra.mrb[0].mxu0 %v326
  %v397 = vpop.f32.mrb[0].mxu0
  %v398 = vadd.f32 %v324, %v397
  %v399 = vpop.f32.mrb[0].mxu0
  %400 = vdwg.mxu0
  %vm401 = vcmask 35840
  %402 = vst.msk [vmem:[%s3] sm:$0xf] %vm401, %v398
  // Predicated region
  $region14: #{_lsd_forward_jit.1} parent=0 // pred_check
    _
  $region15: #{_lsd_forward_jit.1} parent=0 // pred_check_branch
    %404 = sbr.rel (0) target = $region17
  $region16: #{_lsd_forward_jit.1} parent=0 // pred_region
    _
  $region17: #{_lsd_forward_jit.1} parent=0 // pred_fallthru
    _
  // Predicated region
  $region18: #{_lsd_forward_jit.1} parent=0 // pred_check
    _
  $region19: #{_lsd_forward_jit.1} parent=0 // pred_check_branch
    %406 = sbr.rel (0) target = $region21
  $region20: #{_lsd_forward_jit.1} parent=0 // pred_region
    _
  $region21: #{_lsd_forward_jit.1} parent=0 // pred_fallthru
    _

</llo_original>
